<compile_context>
chip_gen: v6e
topology: v6e:2x2x1
jax: 0.10.0
libtpu: 0.0.40
codegen_flags: <defaults>
</compile_context>

<pallas_src>
import functools

import jax
import jax.numpy as jnp
from jax.experimental import pallas as pl
from jax.experimental.pallas import tpu as pltpu

LANES = 128
SUBLANES = 8


def _round_up(x, m):
    return ((x + m - 1) // m) * m


def _chip_config():
    """Per-generation block-size / core-split choices (perf feedback)."""
    try:
        kind = jax.devices()[0].device_kind.lower()
    except Exception:  # defensive: unknown runtime
        kind = ""
    if "v7" in kind or "tpu7" in kind or "7x" in kind:
        # v7x: ~3.2 TB/s HBM -> 4 MiB/input blocks amortize the ~0.35us/step
        # grid overhead; 2 TensorCores -> split the reduction into 2 chunks.
        return {"block_bytes": 4 << 20, "num_chunks": 2, "core_parallel": True}
    if "v6" in kind:
        # v6e: single TC; 4 MiB/input blocks fit the 32 MiB scoped default.
        return {"block_bytes": 4 << 20, "num_chunks": 1, "core_parallel": False}
    if "v5 lite" in kind or "v5e" in kind or "v5lite" in kind:
        # v5e: 16 MiB scoped-VMEM default -> cap at 2 MiB/input blocks.
        return {"block_bytes": 2 << 20, "num_chunks": 1, "core_parallel": False}
    # Unknown chip: conservative v5e-like settings.
    return {"block_bytes": 2 << 20, "num_chunks": 1, "core_parallel": False}


def _mse_partial_kernel(pred_ref, label_ref, out_ref, *,
                        valid_rows, rows_per_tile, n_steps, steps_per_chunk,
                        num_chunks):
    c = pl.program_id(0)          # chunk axis (one per TensorCore on v7x)
    s = pl.program_id(1)          # sequential reduction steps within a chunk

    # The (8,128) output block stays resident across the whole reduction axis,
    # so it doubles as the accumulator (no VMEM scratch, no final copy).
    @pl.when(s == 0)
    def _():
        out_ref[...] = jnp.zeros_like(out_ref)

    step = c * steps_per_chunk + s          # logical (unclamped) block index

    def accumulate(mask_rows):
        d = pred_ref[...].astype(jnp.float32) - label_ref[...].astype(jnp.float32)
        sq = d * d                           # |d|^2 == d*d for real inputs
        if mask_rows:
            # Ragged last block: zero contributions from rows past the data
            # end (those VMEM rows hold unspecified bytes from the clipped DMA).
            row_ids = step * rows_per_tile + jax.lax.broadcasted_iota(
                jnp.int32, sq.shape, 0)
            sq = jnp.where(row_ids < valid_rows, sq, 0.0)
        # VPU-only accumulation: fold the (T,128) tile onto the (8,128) block.
        # The reshape stays on (8,128) tile boundaries, so it is layout-free.
        out_ref[...] += sq.reshape(-1, SUBLANES, LANES).sum(axis=0)

    ragged = (valid_rows % rows_per_tile) != 0
    uneven_split = (num_chunks * steps_per_chunk) != n_steps

    if ragged:
        # Only the last logical block pays the iota/compare/select mask; it
        # also implicitly skips clamped duplicate blocks (step >= n_steps).
        @pl.when(step == n_steps - 1)
        def _():
            accumulate(mask_rows=True)

        @pl.when(step < n_steps - 1)
        def _():
            accumulate(mask_rows=False)
    elif uneven_split:
        # Skip duplicate (clamped) blocks when n_steps doesn't split evenly
        # across chunks.
        @pl.when(step < n_steps)
        def _():
            accumulate(mask_rows=False)
    else:
        accumulate(mask_rows=False)


def mse_pallas(pred, label):
    assert pred.shape == label.shape, "pred/label must have the same shape"
    # NOTE: mixed input dtypes are accepted; both are cast to f32 in-kernel.
    n_elems = pred.size
    assert n_elems > 0

    pred_f = pred.reshape(-1)
    label_f = label.reshape(-1)

    # Split a (rare) sub-lane-width tail off instead of jnp.pad-ing both full
    # arrays: the tail (< 128 elems) is reduced in plain JAX, the bulk streams
    # through the kernel at the 2N-byte read roofline.
    rem = n_elems % LANES
    rows = n_elems // LANES

    tail_sum = jnp.float32(0.0)
    if rem:
        dt = (pred_f[rows * LANES:].astype(jnp.float32)
              - label_f[rows * LANES:].astype(jnp.float32))
        tail_sum = jnp.sum(dt * dt)
        pred_f = pred_f[:rows * LANES]
        label_f = label_f[:rows * LANES]

    if rows == 0:      # tiny input: nothing left for the kernel to do
        return tail_sum / n_elems

    pred_2d = pred_f.reshape(rows, LANES)
    label_2d = label_f.reshape(rows, LANES)

    cfg = _chip_config()
    itemsize = max(pred.dtype.itemsize, label.dtype.itemsize)

    # Sublane multiple scales with packing (8 f32 / 16 bf16 / 32 int8 rows).
    sublane_mult = SUBLANES * max(1, 4 // itemsize)

    # Rows per tile from a per-generation byte budget, so narrower dtypes get
    # proportionally taller blocks (same DMA time per step).
    rows_budget = max(sublane_mult, cfg["block_bytes"] // (LANES * itemsize))
    rpt = min(_round_up(rows_budget, sublane_mult),
              _round_up(rows, sublane_mult))
    n_steps = pl.cdiv(rows, rpt)

    # Split the reduction across chunks (one per TensorCore on v7x); on 1-TC
    # chips (v5e/v6e) this collapses to a single chunk.
    num_chunks = max(1, min(cfg["num_chunks"], n_steps))
    steps_per_chunk = pl.cdiv(n_steps, num_chunks)

    def in_index_map(c, s):
        # Clamp so the DMA never targets a block past the end of the array;
        # clamped duplicates are skipped inside the kernel via pl.when.
        return (jnp.minimum(c * steps_per_chunk + s, n_steps - 1), 0)

    kernel = functools.partial(
        _mse_partial_kernel,
        valid_rows=rows,
        rows_per_tile=rpt,
        n_steps=n_steps,
        steps_per_chunk=steps_per_chunk,
        num_chunks=num_chunks,
    )

    if cfg["core_parallel"] and num_chunks >= 2:
        # v7x: force the chunk axis onto the two TensorCores.
        dim_sem = (pltpu.CORE_PARALLEL, pltpu.ARBITRARY)
    else:
        dim_sem = ("parallel", "arbitrary")

    block_bytes = rpt * LANES * itemsize
    # 2 inputs x 2 pipeline buffers x block + generous headroom for the output
    # block and compiler-internal scratch.
    vmem_limit = 2 * 2 * block_bytes + (8 << 20)

    partials = pl.pallas_call(
        kernel,
        out_shape=jax.ShapeDtypeStruct((num_chunks * SUBLANES, LANES),
                                       jnp.float32),
        grid_spec=pltpu.PrefetchScalarGridSpec(
            num_scalar_prefetch=0,
            grid=(num_chunks, steps_per_chunk),
            in_specs=[
                pl.BlockSpec((rpt, LANES), in_index_map),
                pl.BlockSpec((rpt, LANES), in_index_map),
            ],
            out_specs=pl.BlockSpec((SUBLANES, LANES), lambda c, s: (c, 0)),
        ),
        compiler_params=pltpu.CompilerParams(
            dimension_semantics=dim_sem,
            vmem_limit_bytes=vmem_limit,
        ),
        cost_estimate=pl.CostEstimate(
            flops=3 * rows * LANES,
            transcendentals=0,
            bytes_accessed=2 * rows * LANES * itemsize,
        ),
    )(pred_2d, label_2d)

    # Final cross-chunk / cross-lane reduce and the mean divide in plain JAX.
    return (jnp.sum(partials) + tail_sum) / n_elems


if __name__ == "__main__":
    key = jax.random.PRNGKey(0)
    k1, k2 = jax.random.split(key)
    # NCHW-ish synthetic shapes (MSE is shape-agnostic)
    pred = jax.random.normal(k1, (2, 4, 16, 16), dtype=jnp.float32)
    label = jax.random.normal(k2, (2, 4, 16, 16), dtype=jnp.float32)

    result = jax.block_until_ready(mse_pallas(pred, label))

    # Reference check against plain JAX
    ref = jnp.mean(jnp.abs(pred - label) ** 2)
    assert jnp.allclose(result, ref, rtol=1e-6, atol=1e-6), (result, ref)

    print("KERNEL_OK")
</pallas_src>

<mosaic_0001>
module attributes {stable_mosaic.version = 11 : i64} {
  func.func @_mse_partial_kernel(%arg0: i32, %arg1: i32, %arg2: memref<16x128xf32, #tpu.memory_space<vmem>>, %arg3: memref<16x128xf32, #tpu.memory_space<vmem>>, %arg4: memref<8x128xf32, #tpu.memory_space<vmem>>) attributes {dimension_semantics = [#tpu.dimension_semantics<parallel>, #tpu.dimension_semantics<arbitrary>], iteration_bounds = array<i64: 1, 1>, scalar_prefetch = 0 : i64, scratch_operands = 0 : i64, tpu.core_type = #tpu.core_type<tc>, window_params = [{transform_indices = @transform_0, window_bounds = array<i64: 16, 128>}, {transform_indices = @transform_1, window_bounds = array<i64: 16, 128>}, {transform_indices = @transform_2, window_bounds = array<i64: 8, 128>}]} {
    %c0_i32 = arith.constant 0 : i32
    %0 = arith.cmpi eq, %arg1, %c0_i32 : i32
    %1 = arith.extui %0 : i1 to i32
    %c0_i32_0 = arith.constant 0 : i32
    %2 = arith.cmpi ne, %1, %c0_i32_0 : i32
    scf.if %2 {
      %cst_8 = arith.constant 0.000000e+00 : f32
      %12 = vector.broadcast %cst_8 : f32 to vector<8x128xf32>
      %c0_9 = arith.constant 0 : index
      %c0_10 = arith.constant 0 : index
      %13 = vector.load %arg4[%c0_9, %c0_10] : memref<8x128xf32, #tpu.memory_space<vmem>>, vector<8x128xf32>
      tpu.vector_store %arg4[%c0_9, %c0_10], %12 {strides = array<i32>} : memref<8x128xf32, #tpu.memory_space<vmem>>, vector<8x128xf32>,
    } else {
    }
    %c0 = arith.constant 0 : index
    %c0_1 = arith.constant 0 : index
    %3 = vector.load %arg2[%c0, %c0_1] : memref<16x128xf32, #tpu.memory_space<vmem>>, vector<16x128xf32>
    %c0_2 = arith.constant 0 : index
    %c0_3 = arith.constant 0 : index
    %4 = vector.load %arg3[%c0_2, %c0_3] : memref<16x128xf32, #tpu.memory_space<vmem>>, vector<16x128xf32>
    %5 = arith.subf %3, %4 : vector<16x128xf32>
    %6 = arith.mulf %5, %5 : vector<16x128xf32>
    %c0_4 = arith.constant 0 : index
    %c0_5 = arith.constant 0 : index
    %7 = vector.load %arg4[%c0_4, %c0_5] : memref<8x128xf32, #tpu.memory_space<vmem>>, vector<8x128xf32>
    %8 = vector.shape_cast %6 : vector<16x128xf32> to vector<2x8x128xf32>
    %cst = arith.constant dense<0.000000e+00> : vector<8x128xf32>
    %9 = vector.multi_reduction <add>, %8, %cst [0] : vector<2x8x128xf32> to vector<8x128xf32>
    %10 = arith.addf %7, %9 : vector<8x128xf32>
    %c0_6 = arith.constant 0 : index
    %c0_7 = arith.constant 0 : index
    %11 = vector.load %arg4[%c0_6, %c0_7] : memref<8x128xf32, #tpu.memory_space<vmem>>, vector<8x128xf32>
    tpu.vector_store %arg4[%c0_6, %c0_7], %10 {strides = array<i32>} : memref<8x128xf32, #tpu.memory_space<vmem>>, vector<8x128xf32>,
    return
  }
  func.func @transform_0(%arg0: i32, %arg1: i32) -> (i32, i32) {
    %c1_i32 = arith.constant 1 : i32
    %0 = arith.muli %arg0, %c1_i32 : i32
    %1 = arith.addi %0, %arg1 : i32
    %c0_i32 = arith.constant 0 : i32
    %2 = arith.minsi %1, %c0_i32 : i32
    %c0_i32_0 = arith.constant 0 : i32
    %c0_i32_1 = arith.constant 0 : i32
    return %2, %c0_i32_0 : i32, i32
  }
  func.func @transform_1(%arg0: i32, %arg1: i32) -> (i32, i32) {
    %c1_i32 = arith.constant 1 : i32
    %0 = arith.muli %arg0, %c1_i32 : i32
    %1 = arith.addi %0, %arg1 : i32
    %c0_i32 = arith.constant 0 : i32
    %2 = arith.minsi %1, %c0_i32 : i32
    %c0_i32_0 = arith.constant 0 : i32
    %c0_i32_1 = arith.constant 0 : i32
    return %2, %c0_i32_0 : i32, i32
  }
  func.func @transform_2(%arg0: i32, %arg1: i32) -> (i32, i32) {
    %c0_i32 = arith.constant 0 : i32
    %c0_i32_0 = arith.constant 0 : i32
    return %arg0, %c0_i32 : i32, i32
  }
}

</mosaic_0001>

<llo_original>
// kernel: tpu_custom_call.1
$region0: #{tpu_custom_call.1}
  #allocation0 [shape = 'u32[]', space=smem, size = 0x4, offset = 0x4, fixed_abs, tag = 'smem constant byte address 0x4 - core index']
  #allocation1 [shape = 'u32[144,128]{1,0:T(1,128)}', space=vmem, size = 0x12000, scoped, tag = 'internal scratch']
  %s0 = inlined_call_operand.hbm [shape: f32[16,128], index: 0, kind: input, shape index: {}]
  %s1 = inlined_call_operand.hbm [shape: f32[16,128], index: 1, kind: input, shape index: {}]
  %s2 = inlined_call_operand.hbm [shape: f32[8,128], index: 2, kind: output, shape index: {}]
  %s3 = sld [smem:[#allocation0]]
  $region30: #{tpu_custom_call.1} parent=0
    _
  %s5 = ssub.s32 1, %s3
  %s6 = scalar_select 0, %s5, %s3
  $region1: #{tpu_custom_call.1} parent=0
    #allocation2 [shape = 'u8[8192]{0}', space=vmem, size = 0x2000, scoped, tag = 'input window, operand 0, single buffered']
    #allocation3 [shape = 's32[1]{0}', space=sflag, size = 0x4, scoped, tag = 'scoped memory for tpu_custom_call.1']
    #allocation4 [shape = 's32[1]{0}', space=sflag, size = 0x4, scoped, tag = 'scoped memory for tpu_custom_call.1']
    #allocation5 [shape = 'u8[8192]{0}', space=vmem, size = 0x2000, scoped, tag = 'input window, operand 1, single buffered']
    #allocation6 [shape = 's32[1]{0}', space=sflag, size = 0x4, scoped, tag = 'scoped memory for tpu_custom_call.1']
    #allocation7 [shape = 'u8[4096]{0}', space=vmem, size = 0x1000, scoped, tag = 'output window, operand 0, single buffered']
    %7 = vsyncpa [#allocation3], 0
    %8 = vsyncpa [#allocation6], 0
    %9 = vsyncpa [#allocation4], 0
    // Predicated region
    $region2: #{tpu_custom_call.1} parent=1 // pred_check
      _
    $region3: #{tpu_custom_call.1} parent=1 // pred_check_branch
      %11 = sbr.rel (0) target = $region5
    $region4: #{tpu_custom_call.1} parent=1 // pred_region
      %s12 = sadd.s32 0, 0
      %p13 = scmp.lt.s32.totalorder %s12, 0
      %s14 = scalar_select %p13, %s12, 0
      %s15 = smul.u32 2, %s14
      %s17 = ssub.s32 256, 256
      %18 = vsyncadd [#allocation3], %s17
      %s19 = smul.addr %s15, 128
      %s20 = scalar_lea.hbm %s0, %s19
      %s21 = sshll.u32 [#allocation2], 4
      %s22 = int_to_ptr.vmem [resolvable:$true] %s21
      %27 = dma.hbm_to_vmem [thread:$0]  %s20, 256, %s22, [#allocation3], 128, 128, 8
    $region5: #{tpu_custom_call.1} parent=1 // pred_fallthru
      _
    // Predicated region
    $region6: #{tpu_custom_call.1} parent=1 // pred_check
      _
    $region7: #{tpu_custom_call.1} parent=1 // pred_check_branch
      %29 = sbr.rel (0) target = $region9
    $region8: #{tpu_custom_call.1} parent=1 // pred_region
      %s30 = sadd.s32 0, 0
      %p31 = scmp.lt.s32.totalorder %s30, 0
      %s32 = scalar_select %p31, %s30, 0
      %s33 = smul.u32 2, %s32
      %s35 = ssub.s32 256, 256
      %36 = vsyncadd [#allocation6], %s35
      %s37 = smul.addr %s33, 128
      %s38 = scalar_lea.hbm %s1, %s37
      %s39 = sshll.u32 [#allocation5], 4
      %s40 = int_to_ptr.vmem [resolvable:$true] %s39
      %45 = dma.hbm_to_vmem [thread:$0]  %s38, 256, %s40, [#allocation6], 128, 128, 8
    $region9: #{tpu_custom_call.1} parent=1 // pred_fallthru
      _
    // Predicated region
    $region10: #{tpu_custom_call.1} parent=1 // pred_check
      _
    $region11: #{tpu_custom_call.1} parent=1 // pred_check_branch
      %47 = sbr.rel (0) target = $region13
    $region12: #{tpu_custom_call.1} parent=1 // pred_region
      %48 = dma.done [#allocation3], 256
    $region13: #{tpu_custom_call.1} parent=1 // pred_fallthru
      _
    // Predicated region
    $region14: #{tpu_custom_call.1} parent=1 // pred_check
      _
    $region15: #{tpu_custom_call.1} parent=1 // pred_check_branch
      %50 = sbr.rel (0) target = $region17
    $region16: #{tpu_custom_call.1} parent=1 // pred_region
      %51 = dma.done [#allocation6], 256
    $region17: #{tpu_custom_call.1} parent=1 // pred_fallthru
      _
    %s52 = sadd.s32 0, 0
    %p53 = scmp.lt.s32.totalorder %s52, 0
    %s54 = scalar_select %p53, %s52, 0
    %s55 = smul.u32 2, %s54
    %s56 = sadd.s32 0, 0
    %p57 = scmp.lt.s32.totalorder %s56, 0
    %s58 = scalar_select %p57, %s56, 0
    %s59 = smul.u32 2, %s58
    %p60 = scmp.eq.s32.totalorder 0, 0
    // Predicated region
    $region18: #{tpu_custom_call.1} parent=1 // pred_check
      %p61 = pneg %p60
    $region19: #{tpu_custom_call.1} parent=1 // pred_check_branch
      %63 = sbr.rel (%p61) target = $region21
    $region20: #{tpu_custom_call.1} parent=1 // pred_region
      %64 = vst [vmem:[#allocation7] sm:$0xff] 0.0
    $region21: #{tpu_custom_call.1} parent=1 // pred_fallthru
      _
    %v65 = vld [vmem:[#allocation2] sm:$0xff]
    %v66 = vld [vmem:[#allocation2 + $0x8] sm:$0xff]
    %v67 = vld [vmem:[#allocation5] sm:$0xff]
    %v68 = vld [vmem:[#allocation5 + $0x8] sm:$0xff]
    %v69 = vsub.f32 %v65, %v67
    %v70 = vsub.f32 %v66, %v68
    %v71 = vmul.f32 %v69, %v69
    %v72 = vmul.f32 %v70, %v70
    %v73 = vld [vmem:[#allocation7] sm:$0xff]
    %v74 = vadd.f32 %v71, %v72
    %v75 = vadd.f32 %v73, %v74
    %76 = vst [vmem:[#allocation7] sm:$0xff] %v75
    // Predicated region
    $region22: #{tpu_custom_call.1} parent=1 // pred_check
      _
    $region23: #{tpu_custom_call.1} parent=1 // pred_check_branch
      %78 = sbr.rel (0) target = $region25
    $region24: #{tpu_custom_call.1} parent=1 // pred_region
      %s80 = ssub.s32 128, 128
      %81 = vsyncadd [#allocation4], %s80
      %s83 = sshll.u32 [#allocation7], 4
      %s84 = int_to_ptr.vmem [resolvable:$true] %s83
      %86 = dma.vmem_to_hbm [thread:$0]  %s84, 128, %s2, [#allocation4]
    $region25: #{tpu_custom_call.1} parent=1 // pred_fallthru
      _
    // Predicated region
    $region26: #{tpu_custom_call.1} parent=1 // pred_check
      _
    $region27: #{tpu_custom_call.1} parent=1 // pred_check_branch
      %88 = sbr.rel (0) target = $region29
    $region28: #{tpu_custom_call.1} parent=1 // pred_region
      %89 = dma.done [#allocation4], 128
    $region29: #{tpu_custom_call.1} parent=1 // pred_fallthru
      _
    %90 = vsyncpa [#allocation3], 1
    %91 = vsyncpa [#allocation6], 1
    %92 = vsyncpa [#allocation4], 1

</llo_original>
